<compile_context>
chip_gen: v6e
topology: v6e:2x2x1
jax: 0.10.0
libtpu: 0.0.40
codegen_flags: <defaults>
</compile_context>

<pallas_src>
import jax
import jax.numpy as jnp
from jax.experimental import pallas as pl
from jax.experimental.pallas import tpu as pltpu


def discrete_time_kernel(x_ref, w1_ref, b1_ref, w2_ref, b2_ref, wh_ref, bh_ref,
                         out_ref):
    C = wh_ref.shape[1]                          # n_classes (static, tiny)
    cd = w1_ref.dtype                            # compute dtype of the matmuls

    # ----- encoder MLP: Linear -> ReLU -> Linear -> ReLU (dropout = eval no-op)
    x = x_ref[...]                               # [TB, F] f32 straight from HBM
    h1 = jnp.dot(x.astype(cd), w1_ref[...],
                 preferred_element_type=jnp.float32) + b1_ref[...]
    h1 = jnp.maximum(h1, 0.0)                    # [TB, H] f32
    feat = jnp.dot(h1.astype(cd), w2_ref[...],
                   preferred_element_type=jnp.float32) + b2_ref[...]
    feat = jnp.maximum(feat, 0.0)                # [TB, H] f32

    # ----- head: logits = feat @ Wh + bh -> hazards = sigmoid(logits) -----
    logits = jnp.dot(feat.astype(cd), wh_ref[...],
                     preferred_element_type=jnp.float32) + bh_ref[...]  # [TB, C]
    hazards = jax.nn.sigmoid(logits)

    # ----- surv = cumprod(1 - hazards, dim=1), risk = -sum(surv, dim=1) -----
    # Built fully in registers (C is tiny & static); single concatenated store.
    one_minus = 1.0 - hazards                    # [TB, C]
    cols = [one_minus[:, 0:1]]
    for k in range(1, C):
        cols.append(cols[-1] * one_minus[:, k:k + 1])
    surv = jnp.concatenate(cols, axis=1)         # [TB, C]
    risk = -jnp.sum(surv, axis=1, keepdims=True)  # [TB, 1] (XLU reduce)

    # ----- one packed slab write: [feat | logits | hazards | surv | risk] -----
    out_ref[...] = jnp.concatenate([feat, logits, hazards, surv, risk], axis=1)


def _pick_batch_tile(B, batch_block):
    """Large batch tiles amortize per-grid-step overhead; cap so big batches
    always get >= 2 grid steps (dual-TensorCore sharding on v7x)."""
    TB = min(batch_block, B)
    if TB < B:
        TB = max(8, (TB // 8) * 8)               # sublane-aligned (f32)
    if B >= 1024:
        half = -(-B // 2)                        # cdiv(B, 2)
        half = max(8, -(-half // 8) * 8)         # round UP to multiple of 8
        TB = min(TB, half)
    return TB


def discrete_time_forward(x, w1, b1, w2, b2, wh, bh, *,
                          batch_block=4096, compute_dtype=jnp.float32):
    B, F = x.shape
    H = w1.shape[1]
    C = wh.shape[1]
    W = H + 3 * C + 1                            # packed lane width

    TB = _pick_batch_tile(B, batch_block)
    grid = (pl.cdiv(B, TB),)

    # Weights are tiny & VMEM-resident: cast to the compute dtype here (cheap).
    # x is NOT cast in the wrapper (avoids an extra HBM round-trip).
    w1_c = w1.astype(compute_dtype)
    w2_c = w2.astype(compute_dtype)
    wh_c = wh.astype(compute_dtype)
    b1_f = b1.astype(jnp.float32)
    b2_f = b2.astype(jnp.float32)
    bh_f = bh.astype(jnp.float32)

    resident = lambda shape: pl.BlockSpec(shape, lambda i: (0, 0))
    tiled = lambda shape: pl.BlockSpec(shape, lambda i: (i, 0))

    packed = pl.pallas_call(
        discrete_time_kernel,
        out_shape=jax.ShapeDtypeStruct((B, W), jnp.float32),
        grid=grid,
        in_specs=[
            tiled((TB, F)),       # x        (batch-tiled, f32)
            resident((F, H)),     # w1       (resident in VMEM)
            resident((1, H)),     # b1
            resident((H, H)),     # w2
            resident((1, H)),     # b2
            resident((H, C)),     # wh
            resident((1, C)),     # bh
        ],
        out_specs=tiled((TB, W)),                # single packed slab
        compiler_params=pltpu.CompilerParams(
            dimension_semantics=("parallel",)),
    )(x, w1_c, b1_f, w2_c, b2_f, wh_c, bh_f)

    return {
        "features": packed[:, 0:H],
        "logits": packed[:, H:H + C],
        "hazards": packed[:, H + C:H + 2 * C],
        "surv": packed[:, H + 2 * C:H + 3 * C],
        "risk": packed[:, H + 3 * C],
    }


def _reference_forward(x, w1, b1, w2, b2, wh, bh):
    """Pure-JAX f32 reference (mirrors the PyTorch forward)."""
    h1 = jnp.maximum(jnp.dot(x, w1) + b1, 0.0)
    feat = jnp.maximum(jnp.dot(h1, w2) + b2, 0.0)
    logits = jnp.dot(feat, wh) + bh
    hazards = jax.nn.sigmoid(logits)
    surv = jnp.cumprod(1.0 - hazards, axis=1)
    risk = -jnp.sum(surv, axis=1)
    return feat, logits, hazards, surv, risk


if __name__ == "__main__":
    # Small shapes consistent with the module's forward:
    B = 8            # batch
    n_features = 32  # args.n_features
    d_hid = 32       # args.d_hid
    n_classes = 4    # args.n_classes (discrete time intervals)

    key = jax.random.PRNGKey(0)
    kx, k1, k2, k3, k4, k5, k6 = jax.random.split(key, 7)

    x = jax.random.normal(kx, (B, n_features), dtype=jnp.float32)
    w1 = jax.random.normal(k1, (n_features, d_hid), dtype=jnp.float32) * 0.1
    b1 = jax.random.normal(k2, (1, d_hid), dtype=jnp.float32) * 0.1
    w2 = jax.random.normal(k3, (d_hid, d_hid), dtype=jnp.float32) * 0.1
    b2 = jax.random.normal(k4, (1, d_hid), dtype=jnp.float32) * 0.1
    wh = jax.random.normal(k5, (d_hid, n_classes), dtype=jnp.float32) * 0.1
    bh = jax.random.normal(k6, (1, n_classes), dtype=jnp.float32) * 0.1

    # --- single-tile run (grid = 1) ---
    out = discrete_time_forward(x, w1, b1, w2, b2, wh, bh)
    jax.block_until_ready(out)

    feat_r, logits_r, hazards_r, surv_r, risk_r = _reference_forward(
        x, w1, b1, w2, b2, wh, bh)

    assert jnp.allclose(out["features"], feat_r, atol=1e-5, rtol=1e-5)
    assert jnp.allclose(out["logits"], logits_r, atol=1e-5, rtol=1e-5)
    assert jnp.allclose(out["hazards"], hazards_r, atol=1e-5, rtol=1e-5)
    assert jnp.allclose(out["surv"], surv_r, atol=1e-5, rtol=1e-5)
    assert jnp.allclose(out["risk"], risk_r, atol=1e-5, rtol=1e-5)
    assert out["risk"].shape == (B,)
    assert out["surv"].shape == (B, n_classes)

    # --- multi-tile run with a ragged tail (exercises grid > 1 + clipping) ---
    B2 = 272
    x2 = jax.random.normal(jax.random.PRNGKey(1), (B2, n_features),
                           dtype=jnp.float32)
    out2 = discrete_time_forward(x2, w1, b1, w2, b2, wh, bh, batch_block=128)
    jax.block_until_ready(out2)
    feat2, logits2, hazards2, surv2, risk2 = _reference_forward(
        x2, w1, b1, w2, b2, wh, bh)
    assert jnp.allclose(out2["features"], feat2, atol=1e-5, rtol=1e-5)
    assert jnp.allclose(out2["logits"], logits2, atol=1e-5, rtol=1e-5)
    assert jnp.allclose(out2["hazards"], hazards2, atol=1e-5, rtol=1e-5)
    assert jnp.allclose(out2["surv"], surv2, atol=1e-5, rtol=1e-5)
    assert jnp.allclose(out2["risk"], risk2, atol=1e-5, rtol=1e-5)

    print("KERNEL_OK")
</pallas_src>

<mosaic_0001>
module attributes {stable_mosaic.version = 11 : i64} {
  func.func @discrete_time_kernel(%arg0: i32, %arg1: memref<8x32xf32, #tpu.memory_space<vmem>>, %arg2: memref<32x32xf32, #tpu.memory_space<vmem>>, %arg3: memref<1x32xf32, #tpu.memory_space<vmem>>, %arg4: memref<32x32xf32, #tpu.memory_space<vmem>>, %arg5: memref<1x32xf32, #tpu.memory_space<vmem>>, %arg6: memref<32x4xf32, #tpu.memory_space<vmem>>, %arg7: memref<1x4xf32, #tpu.memory_space<vmem>>, %arg8: memref<8x45xf32, #tpu.memory_space<vmem>>) attributes {dimension_semantics = [#tpu.dimension_semantics<parallel>], iteration_bounds = array<i64: 1>, scalar_prefetch = 0 : i64, scratch_operands = 0 : i64, tpu.core_type = #tpu.core_type<tc>, window_params = [{transform_indices = @transform_0, window_bounds = array<i64: 8, 32>}, {pipeline_mode = #tpu.pipeline_mode<synchronous>, transform_indices = @transform_1, window_bounds = array<i64: 32, 32>}, {pipeline_mode = #tpu.pipeline_mode<synchronous>, transform_indices = @transform_2, window_bounds = array<i64: 1, 32>}, {pipeline_mode = #tpu.pipeline_mode<synchronous>, transform_indices = @transform_3, window_bounds = array<i64: 32, 32>}, {pipeline_mode = #tpu.pipeline_mode<synchronous>, transform_indices = @transform_4, window_bounds = array<i64: 1, 32>}, {pipeline_mode = #tpu.pipeline_mode<synchronous>, transform_indices = @transform_5, window_bounds = array<i64: 32, 4>}, {pipeline_mode = #tpu.pipeline_mode<synchronous>, transform_indices = @transform_6, window_bounds = array<i64: 1, 4>}, {transform_indices = @transform_7, window_bounds = array<i64: 8, 45>}]} {
    %c0 = arith.constant 0 : index
    %c0_0 = arith.constant 0 : index
    %0 = vector.load %arg1[%c0, %c0_0] : memref<8x32xf32, #tpu.memory_space<vmem>>, vector<8x32xf32>
    %c0_1 = arith.constant 0 : index
    %c0_2 = arith.constant 0 : index
    %1 = vector.load %arg2[%c0_1, %c0_2] : memref<32x32xf32, #tpu.memory_space<vmem>>, vector<32x32xf32>
    %cst = arith.constant dense<0.000000e+00> : vector<8x32xf32>
    %2 = tpu.matmul %0, %1, %cst {dimension_numbers = #tpu.dot_dimension_numbers<[1], [0], [0], [1], [0, 0, 1, 1], [], []>} : vector<8x32xf32>, vector<32x32xf32>, vector<8x32xf32> -> vector<8x32xf32>
    %c0_3 = arith.constant 0 : index
    %c0_4 = arith.constant 0 : index
    %3 = vector.load %arg3[%c0_3, %c0_4] : memref<1x32xf32, #tpu.memory_space<vmem>>, vector<1x32xf32>
    %4 = vector.broadcast %3 : vector<1x32xf32> to vector<8x32xf32>
    %5 = arith.addf %2, %4 : vector<8x32xf32>
    %cst_5 = arith.constant 0.000000e+00 : f32
    %6 = vector.broadcast %cst_5 : f32 to vector<8x32xf32>
    %7 = arith.maximumf %5, %6 : vector<8x32xf32>
    %c0_6 = arith.constant 0 : index
    %c0_7 = arith.constant 0 : index
    %8 = vector.load %arg4[%c0_6, %c0_7] : memref<32x32xf32, #tpu.memory_space<vmem>>, vector<32x32xf32>
    %cst_8 = arith.constant dense<0.000000e+00> : vector<8x32xf32>
    %9 = tpu.matmul %7, %8, %cst_8 {dimension_numbers = #tpu.dot_dimension_numbers<[1], [0], [0], [1], [0, 0, 1, 1], [], []>} : vector<8x32xf32>, vector<32x32xf32>, vector<8x32xf32> -> vector<8x32xf32>
    %c0_9 = arith.constant 0 : index
    %c0_10 = arith.constant 0 : index
    %10 = vector.load %arg5[%c0_9, %c0_10] : memref<1x32xf32, #tpu.memory_space<vmem>>, vector<1x32xf32>
    %11 = vector.broadcast %10 : vector<1x32xf32> to vector<8x32xf32>
    %12 = arith.addf %9, %11 : vector<8x32xf32>
    %cst_11 = arith.constant 0.000000e+00 : f32
    %13 = vector.broadcast %cst_11 : f32 to vector<8x32xf32>
    %14 = arith.maximumf %12, %13 : vector<8x32xf32>
    %c0_12 = arith.constant 0 : index
    %c0_13 = arith.constant 0 : index
    %15 = vector.load %arg6[%c0_12, %c0_13] : memref<32x4xf32, #tpu.memory_space<vmem>>, vector<32x4xf32>
    %cst_14 = arith.constant dense<0.000000e+00> : vector<8x4xf32>
    %16 = tpu.matmul %14, %15, %cst_14 {dimension_numbers = #tpu.dot_dimension_numbers<[1], [0], [0], [1], [0, 0, 1, 1], [], []>} : vector<8x32xf32>, vector<32x4xf32>, vector<8x4xf32> -> vector<8x4xf32>
    %c0_15 = arith.constant 0 : index
    %c0_16 = arith.constant 0 : index
    %17 = vector.load %arg7[%c0_15, %c0_16] : memref<1x4xf32, #tpu.memory_space<vmem>>, vector<1x4xf32>
    %18 = vector.broadcast %17 : vector<1x4xf32> to vector<8x4xf32>
    %19 = arith.addf %16, %18 : vector<8x4xf32>
    %20 = arith.negf %19 : vector<8x4xf32>
    %21 = math.exp %20 : vector<8x4xf32>
    %cst_17 = arith.constant 1.000000e+00 : f32
    %22 = vector.broadcast %cst_17 : f32 to vector<8x4xf32>
    %23 = arith.addf %22, %21 : vector<8x4xf32>
    %24 = arith.divf %22, %23 : vector<8x4xf32>
    %cst_18 = arith.constant 1.000000e+00 : f32
    %25 = vector.broadcast %cst_18 : f32 to vector<8x4xf32>
    %26 = arith.subf %25, %24 : vector<8x4xf32>
    %27 = vector.extract_strided_slice %26 {offsets = [0, 0], sizes = [8, 1], strides = [1, 1]} : vector<8x4xf32> to vector<8x1xf32>
    %28 = vector.extract_strided_slice %26 {offsets = [0, 1], sizes = [8, 1], strides = [1, 1]} : vector<8x4xf32> to vector<8x1xf32>
    %29 = arith.mulf %27, %28 : vector<8x1xf32>
    %30 = vector.extract_strided_slice %26 {offsets = [0, 2], sizes = [8, 1], strides = [1, 1]} : vector<8x4xf32> to vector<8x1xf32>
    %31 = arith.mulf %29, %30 : vector<8x1xf32>
    %32 = vector.extract_strided_slice %26 {offsets = [0, 3], sizes = [8, 1], strides = [1, 1]} : vector<8x4xf32> to vector<8x1xf32>
    %33 = arith.mulf %31, %32 : vector<8x1xf32>
    %34 = tpu.concatenate %27, %29, %31, %33 in 1 : vector<8x1xf32>, vector<8x1xf32>, vector<8x1xf32>, vector<8x1xf32> -> vector<8x4xf32>
    %cst_19 = arith.constant dense<0.000000e+00> : vector<8xf32>
    %35 = vector.multi_reduction <add>, %34, %cst_19 [1] : vector<8x4xf32> to vector<8xf32>
    %36 = vector.shape_cast %35 : vector<8xf32> to vector<8x1xf32>
    %cst_20 = arith.constant 0.000000e+00 : f32
    %37 = vector.broadcast %cst_20 : f32 to vector<8x1xf32>
    %38 = arith.subf %37, %36 : vector<8x1xf32>
    %39 = tpu.concatenate %14, %19, %24, %34, %38 in 1 : vector<8x32xf32>, vector<8x4xf32>, vector<8x4xf32>, vector<8x4xf32>, vector<8x1xf32> -> vector<8x45xf32>
    %c0_21 = arith.constant 0 : index
    %c0_22 = arith.constant 0 : index
    %40 = vector.load %arg8[%c0_21, %c0_22] : memref<8x45xf32, #tpu.memory_space<vmem>>, vector<8x45xf32>
    tpu.vector_store %arg8[%c0_21, %c0_22], %39 {strides = array<i32>} : memref<8x45xf32, #tpu.memory_space<vmem>>, vector<8x45xf32>,
    return
  }
  func.func @transform_0(%arg0: i32) -> (i32, i32) {
    %c0_i32 = arith.constant 0 : i32
    %c0_i32_0 = arith.constant 0 : i32
    return %arg0, %c0_i32 : i32, i32
  }
  func.func @transform_1(%arg0: i32) -> (i32, i32) {
    %c0_i32 = arith.constant 0 : i32
    %c0_i32_0 = arith.constant 0 : i32
    %c0_i32_1 = arith.constant 0 : i32
    return %c0_i32, %c0_i32_0 : i32, i32
  }
  func.func @transform_2(%arg0: i32) -> (i32, i32) {
    %c0_i32 = arith.constant 0 : i32
    %c0_i32_0 = arith.constant 0 : i32
    %c0_i32_1 = arith.constant 0 : i32
    return %c0_i32, %c0_i32_0 : i32, i32
  }
  func.func @transform_3(%arg0: i32) -> (i32, i32) {
    %c0_i32 = arith.constant 0 : i32
    %c0_i32_0 = arith.constant 0 : i32
    %c0_i32_1 = arith.constant 0 : i32
    return %c0_i32, %c0_i32_0 : i32, i32
  }
  func.func @transform_4(%arg0: i32) -> (i32, i32) {
    %c0_i32 = arith.constant 0 : i32
    %c0_i32_0 = arith.constant 0 : i32
    %c0_i32_1 = arith.constant 0 : i32
    return %c0_i32, %c0_i32_0 : i32, i32
  }
  func.func @transform_5(%arg0: i32) -> (i32, i32) {
    %c0_i32 = arith.constant 0 : i32
    %c0_i32_0 = arith.constant 0 : i32
    %c0_i32_1 = arith.constant 0 : i32
    return %c0_i32, %c0_i32_0 : i32, i32
  }
  func.func @transform_6(%arg0: i32) -> (i32, i32) {
    %c0_i32 = arith.constant 0 : i32
    %c0_i32_0 = arith.constant 0 : i32
    %c0_i32_1 = arith.constant 0 : i32
    return %c0_i32, %c0_i32_0 : i32, i32
  }
  func.func @transform_7(%arg0: i32) -> (i32, i32) {
    %c0_i32 = arith.constant 0 : i32
    %c0_i32_0 = arith.constant 0 : i32
    return %arg0, %c0_i32 : i32, i32
  }
}

</mosaic_0001>

<llo_original>
// kernel: tpu_custom_call.1
$region0: #{tpu_custom_call.1}
  #allocation0 [shape = 'u32[]', space=smem, size = 0x4, offset = 0x4, fixed_abs, tag = 'smem constant byte address 0x4 - core index']
  #allocation1 [shape = 'u32[144,128]{1,0:T(1,128)}', space=vmem, size = 0x12000, scoped, tag = 'internal scratch']
  %s0 = inlined_call_operand.hbm [shape: f32[8,32], index: 0, kind: input, shape index: {}]
  %s1 = inlined_call_operand.vmem [shape: f32[32,32], index: 1, kind: input, shape index: {}]
  %s2 = inlined_call_operand.vmem [shape: f32[1,32], index: 2, kind: input, shape index: {}]
  %s3 = inlined_call_operand.hbm [shape: f32[32,32], index: 3, kind: input, shape index: {}]
  %s4 = inlined_call_operand.vmem [shape: f32[1,32], index: 4, kind: input, shape index: {}]
  %s5 = inlined_call_operand.vmem [shape: f32[32,4], index: 5, kind: input, shape index: {}]
  %s6 = inlined_call_operand.vmem [shape: f32[1,4], index: 6, kind: input, shape index: {}]
  %s7 = inlined_call_operand.hbm [shape: f32[8,45], index: 7, kind: output, shape index: {}]
  %s8 = sld [smem:[#allocation0]]
  $region46: #{tpu_custom_call.1} parent=0
    _
  %s10 = ssub.s32 1, %s8
  %s11 = scalar_select 0, %s10, %s8
  $region1: #{tpu_custom_call.1} parent=0
    #allocation2 [shape = 'u8[4096]{0}', space=vmem, size = 0x1000, scoped, tag = 'input window, operand 0, single buffered']
    #allocation3 [shape = 's32[1]{0}', space=sflag, size = 0x4, scoped, tag = 'scoped memory for tpu_custom_call.1']
    #allocation4 [shape = 's32[1]{0}', space=sflag, size = 0x4, scoped, tag = 'scoped memory for tpu_custom_call.1']
    #allocation5 [shape = 'u8[16384]{0}', space=vmem, size = 0x4000, scoped, tag = 'input window, operand 3, single buffered']
    #allocation6 [shape = 's32[1]{0}', space=sflag, size = 0x4, scoped, tag = 'scoped memory for tpu_custom_call.1']
    #allocation7 [shape = 'u8[4096]{0}', space=vmem, size = 0x1000, scoped, tag = 'output window, operand 0, single buffered']
    %12 = vsyncpa [#allocation3], 0
    %13 = vsyncpa [#allocation6], 0
    %14 = vsyncpa [#allocation4], 0
    // Predicated region
    $region2: #{tpu_custom_call.1} parent=1 // pred_check
      _
    $region3: #{tpu_custom_call.1} parent=1 // pred_check_branch
      %16 = sbr.rel (0) target = $region5
    $region4: #{tpu_custom_call.1} parent=1 // pred_region
      %s18 = ssub.s32 128, 128
      %19 = vsyncadd [#allocation3], %s18
      %s21 = sshll.u32 [#allocation2], 4
      %s22 = int_to_ptr.vmem [resolvable:$true] %s21
      %24 = dma.hbm_to_vmem [thread:$0]  %s0, 128, %s22, [#allocation3]
    $region5: #{tpu_custom_call.1} parent=1 // pred_fallthru
      _
    // Predicated region
    $region6: #{tpu_custom_call.1} parent=1 // pred_check
      _
    $region7: #{tpu_custom_call.1} parent=1 // pred_check_branch
      %26 = sbr.rel (0) target = $region9
    $region8: #{tpu_custom_call.1} parent=1 // pred_region
      _
    $region9: #{tpu_custom_call.1} parent=1 // pred_fallthru
      _
    // Predicated region
    $region10: #{tpu_custom_call.1} parent=1 // pred_check
      _
    $region11: #{tpu_custom_call.1} parent=1 // pred_check_branch
      %28 = sbr.rel (0) target = $region13
    $region12: #{tpu_custom_call.1} parent=1 // pred_region
      _
    $region13: #{tpu_custom_call.1} parent=1 // pred_fallthru
      _
    // Predicated region
    $region14: #{tpu_custom_call.1} parent=1 // pred_check
      _
    $region15: #{tpu_custom_call.1} parent=1 // pred_check_branch
      %30 = sbr.rel (0) target = $region17
    $region16: #{tpu_custom_call.1} parent=1 // pred_region
      %s32 = ssub.s32 512, 512
      %33 = vsyncadd [#allocation6], %s32
      %s34 = sshll.u32 [#allocation5], 4
      %s35 = int_to_ptr.vmem [resolvable:$true] %s34
      %40 = dma.hbm_to_vmem [thread:$0]  %s3, 512, %s35, [#allocation6], 128, 128, 8
    $region17: #{tpu_custom_call.1} parent=1 // pred_fallthru
      _
    // Predicated region
    $region18: #{tpu_custom_call.1} parent=1 // pred_check
      _
    $region19: #{tpu_custom_call.1} parent=1 // pred_check_branch
      %42 = sbr.rel (0) target = $region21
    $region20: #{tpu_custom_call.1} parent=1 // pred_region
      _
    $region21: #{tpu_custom_call.1} parent=1 // pred_fallthru
      _
    // Predicated region
    $region22: #{tpu_custom_call.1} parent=1 // pred_check
      _
    $region23: #{tpu_custom_call.1} parent=1 // pred_check_branch
      %44 = sbr.rel (0) target = $region25
    $region24: #{tpu_custom_call.1} parent=1 // pred_region
      _
    $region25: #{tpu_custom_call.1} parent=1 // pred_fallthru
      _
    // Predicated region
    $region26: #{tpu_custom_call.1} parent=1 // pred_check
      _
    $region27: #{tpu_custom_call.1} parent=1 // pred_check_branch
      %46 = sbr.rel (0) target = $region29
    $region28: #{tpu_custom_call.1} parent=1 // pred_region
      _
    $region29: #{tpu_custom_call.1} parent=1 // pred_fallthru
      _
    // Predicated region
    $region30: #{tpu_custom_call.1} parent=1 // pred_check
      _
    $region31: #{tpu_custom_call.1} parent=1 // pred_check_branch
      %48 = sbr.rel (0) target = $region33
    $region32: #{tpu_custom_call.1} parent=1 // pred_region
      %49 = dma.done [#allocation3], 128
    $region33: #{tpu_custom_call.1} parent=1 // pred_fallthru
      _
    // Predicated region
    $region34: #{tpu_custom_call.1} parent=1 // pred_check
      _
    $region35: #{tpu_custom_call.1} parent=1 // pred_check_branch
      %51 = sbr.rel (0) target = $region37
    $region36: #{tpu_custom_call.1} parent=1 // pred_region
      %52 = dma.done [#allocation6], 512
    $region37: #{tpu_custom_call.1} parent=1 // pred_fallthru
      _
    %v53 = vld [vmem:[#allocation2] sm:$0xff]
    %v54 = vld [vmem:[%s1] sm:$0xff]
    %v55 = vld [vmem:[%s1 + $0x8] sm:$0xff]
    %v56 = vld [vmem:[%s1 + $0x10] sm:$0xff]
    %v57 = vld [vmem:[%s1 + $0x18] sm:$0xff]
    %v58 = vld [vmem:[%s2] sm:$0x1]
    %v60 = vlaneseq
    %v61 = vshrl.u32 %v60, 7
    %v62 = vsub.s32 0, %v61
    %v63 = vrot.slane %v58, %v62
    %vm65 = vcmask 261120
    %v67 = vsel %vm65, %v53, 0
    %69 = vmatprep.subr.mxu0 0.0
    %70 = vmatpush1.msra.mxu0 0.0
    %71 = vmatprep.subr.mxu0 0.0
    %72 = vmatpush1.msra.mxu0 0.0
    %73 = vmatprep.subr.mxu0 0.0
    %74 = vmatpush1.msra.mxu0 0.0
    %75 = vmatprep.subr.mxu0 0.0
    %76 = vmatpush1.msra.mxu0 0.0
    %77 = vmatprep.subr.mxu0 0.0
    %78 = vmatpush1.msra.mxu0 0.0
    %79 = vmatprep.subr.mxu0 0.0
    %80 = vmatpush1.msra.mxu0 0.0
    %81 = vmatprep.subr.mxu0 0.0
    %82 = vmatpush1.msra.mxu0 0.0
    %83 = vmatprep.subr.mxu0 0.0
    %84 = vmatpush1.msra.mxu0 0.0
    %85 = vmatprep.subr.mxu0 0.0
    %86 = vmatpush1.msra.mxu0 0.0
    %87 = vmatprep.subr.mxu0 0.0
    %88 = vmatpush1.msra.mxu0 0.0
    %89 = vmatprep.subr.mxu0 0.0
    %90 = vmatpush1.msra.mxu0 0.0
    %91 = vmatprep.subr.mxu0 0.0
    %92 = vmatpush1.msra.mxu0 0.0
    %93 = vmatprep.subr.mxu0 0.0
    %94 = vmatpush1.msra.mxu0 %v57
    %95 = vmatprep.subr.mxu0 0.0
    %96 = vmatpush1.msra.mxu0 %v56
    %97 = vmatprep.subr.mxu0 0.0
    %98 = vmatpush1.msra.mxu0 %v55
    %99 = vmatprep.subr.mxu0 0.0
    %100 = vmatpush1.msra.mxu0 %v54
    %101 = vmatprep.subr.mxu0 0.0
    %102 = vmatpush2.msra.mxu0 0.0
    %103 = vmatprep.subr.mxu0 0.0
    %104 = vmatpush2.msra.mxu0 0.0
    %105 = vmatprep.subr.mxu0 0.0
    %106 = vmatpush2.msra.mxu0 0.0
    %107 = vmatprep.subr.mxu0 0.0
    %108 = vmatpush2.msra.mxu0 0.0
    %109 = vmatprep.subr.mxu0 0.0
    %110 = vmatpush2.msra.mxu0 0.0
    %111 = vmatprep.subr.mxu0 0.0
    %112 = vmatpush2.msra.mxu0 0.0
    %113 = vmatprep.subr.mxu0 0.0
    %114 = vmatpush2.msra.mxu0 0.0
    %115 = vmatprep.subr.mxu0 0.0
    %116 = vmatpush2.msra.mxu0 0.0
    %117 = vmatprep.subr.mxu0 0.0
    %118 = vmatpush2.msra.mxu0 0.0
    %119 = vmatprep.subr.mxu0 0.0
    %120 = vmatpush2.msra.mxu0 0.0
    %121 = vmatprep.subr.mxu0 0.0
    %122 = vmatpush2.msra.mxu0 0.0
    %123 = vmatprep.subr.mxu0 0.0
    %124 = vmatpush2.msra.mxu0 0.0
    %125 = vmatprep.subr.mxu0 0.0
    %126 = vmatpush2.msra.mxu0 0.0
    %127 = vmatprep.subr.mxu0 0.0
    %128 = vmatpush2.msra.mxu0 0.0
    %129 = vmatprep.subr.mxu0 0.0
    %130 = vmatpush2.msra.mxu0 0.0
    %131 = vmatprep.subr.mxu0 0.0
    %132 = vmatpush2.msra.mxu0 0.0
    %133 = vmatprep.mubr.f32.mxu0 0.0
    %134 = vmatmul.mubr.f32.gmra.mxu0 %v67
    %v135 = vpop.f32.mrf.mxu0
    %v136 = vadd.f32 %v63, %v135
    %v137 = vpop.f32.mrf.mxu0
    %138 = vdwg.mxu0
    %v139 = vmax.f32 %v136, 0.0
    %v140 = vld [vmem:[#allocation5] sm:$0xff]
    %v141 = vld [vmem:[#allocation5 + $0x8] sm:$0xff]
    %v142 = vld [vmem:[#allocation5 + $0x10] sm:$0xff]
    %v143 = vld [vmem:[#allocation5 + $0x18] sm:$0xff]
    %v144 = vld [vmem:[%s4] sm:$0x1]
    %v146 = vlaneseq
    %v147 = vshrl.u32 %v146, 7
    %v148 = vsub.s32 0, %v147
    %v149 = vrot.slane %v144, %v148
    %v152 = vsel %vm65, %v139, 0
    %154 = vmatprep.subr.mxu0 0.0
    %155 = vmatpush1.msra.mxu0 0.0
    %156 = vmatprep.subr.mxu0 0.0
    %157 = vmatpush1.msra.mxu0 0.0
    %158 = vmatprep.subr.mxu0 0.0
    %159 = vmatpush1.msra.mxu0 0.0
    %160 = vmatprep.subr.mxu0 0.0
    %161 = vmatpush1.msra.mxu0 0.0
    %162 = vmatprep.subr.mxu0 0.0
    %163 = vmatpush1.msra.mxu0 0.0
    %164 = vmatprep.subr.mxu0 0.0
    %165 = vmatpush1.msra.mxu0 0.0
    %166 = vmatprep.subr.mxu0 0.0
    %167 = vmatpush1.msra.mxu0 0.0
    %168 = vmatprep.subr.mxu0 0.0
    %169 = vmatpush1.msra.mxu0 0.0
    %170 = vmatprep.subr.mxu0 0.0
    %171 = vmatpush1.msra.mxu0 0.0
    %172 = vmatprep.subr.mxu0 0.0
    %173 = vmatpush1.msra.mxu0 0.0
    %174 = vmatprep.subr.mxu0 0.0
    %175 = vmatpush1.msra.mxu0 0.0
    %176 = vmatprep.subr.mxu0 0.0
    %177 = vmatpush1.msra.mxu0 0.0
    %178 = vmatprep.subr.mxu0 0.0
    %179 = vmatpush1.msra.mxu0 %v143
    %180 = vmatprep.subr.mxu0 0.0
    %181 = vmatpush1.msra.mxu0 %v142
    %182 = vmatprep.subr.mxu0 0.0
    %183 = vmatpush1.msra.mxu0 %v141
    %184 = vmatprep.subr.mxu0 0.0
    %185 = vmatpush1.msra.mxu0 %v140
    %186 = vmatprep.subr.mxu0 0.0
    %187 = vmatpush2.msra.mxu0 0.0
    %188 = vmatprep.subr.mxu0 0.0
    %189 = vmatpush2.msra.mxu0 0.0
    %190 = vmatprep.subr.mxu0 0.0
    %191 = vmatpush2.msra.mxu0 0.0
    %192 = vmatprep.subr.mxu0 0.0
    %193 = vmatpush2.msra.mxu0 0.0
    %194 = vmatprep.subr.mxu0 0.0
    %195 = vmatpush2.msra.mxu0 0.0
    %196 = vmatprep.subr.mxu0 0.0
    %197 = vmatpush2.msra.mxu0 0.0
    %198 = vmatprep.subr.mxu0 0.0
    %199 = vmatpush2.msra.mxu0 0.0
    %200 = vmatprep.subr.mxu0 0.0
    %201 = vmatpush2.msra.mxu0 0.0
    %202 = vmatprep.subr.mxu0 0.0
    %203 = vmatpush2.msra.mxu0 0.0
    %204 = vmatprep.subr.mxu0 0.0
    %205 = vmatpush2.msra.mxu0 0.0
    %206 = vmatprep.subr.mxu0 0.0
    %207 = vmatpush2.msra.mxu0 0.0
    %208 = vmatprep.subr.mxu0 0.0
    %209 = vmatpush2.msra.mxu0 0.0
    %210 = vmatprep.subr.mxu0 0.0
    %211 = vmatpush2.msra.mxu0 0.0
    %212 = vmatprep.subr.mxu0 0.0
    %213 = vmatpush2.msra.mxu0 0.0
    %214 = vmatprep.subr.mxu0 0.0
    %215 = vmatpush2.msra.mxu0 0.0
    %216 = vmatprep.subr.mxu0 0.0
    %217 = vmatpush2.msra.mxu0 0.0
    %218 = vmatprep.mubr.f32.mxu0 0.0
    %219 = vmatmul.mubr.f32.gmra.mxu0 %v152
    %v220 = vpop.f32.mrf.mxu0
    %v221 = vadd.f32 %v149, %v220
    %v222 = vpop.f32.mrf.mxu0
    %223 = vdwg.mxu0
    %v224 = vmax.f32 %v221, 0.0
    %v225 = vld [vmem:[%s5] sm:$0xff]
    %v226 = vld [vmem:[%s5 + $0x8] sm:$0xff]
    %v227 = vld [vmem:[%s5 + $0x10] sm:$0xff]
    %v228 = vld [vmem:[%s5 + $0x18] sm:$0xff]
    %v229 = vld [vmem:[%s6] sm:$0x1]
    %v231 = vlaneseq
    %v232 = vshrl.u32 %v231, 7
    %v233 = vsub.s32 0, %v232
    %v234 = vrot.slane %v229, %v233
    %v237 = vsel %vm65, %v224, 0
    %239 = vmatprep.subr.mxu0 0.0
    %240 = vmatpush1.msra.mxu0 0.0
    %241 = vmatprep.subr.mxu0 0.0
    %242 = vmatpush1.msra.mxu0 0.0
    %243 = vmatprep.subr.mxu0 0.0
    %244 = vmatpush1.msra.mxu0 0.0
    %245 = vmatprep.subr.mxu0 0.0
    %246 = vmatpush1.msra.mxu0 0.0
    %247 = vmatprep.subr.mxu0 0.0
    %248 = vmatpush1.msra.mxu0 0.0
    %249 = vmatprep.subr.mxu0 0.0
    %250 = vmatpush1.msra.mxu0 0.0
    %251 = vmatprep.subr.mxu0 0.0
    %252 = vmatpush1.msra.mxu0 0.0
    %253 = vmatprep.subr.mxu0 0.0
    %254 = vmatpush1.msra.mxu0 0.0
    %255 = vmatprep.subr.mxu0 0.0
    %256 = vmatpush1.msra.mxu0 0.0
    %257 = vmatprep.subr.mxu0 0.0
    %258 = vmatpush1.msra.mxu0 0.0
    %259 = vmatprep.subr.mxu0 0.0
    %260 = vmatpush1.msra.mxu0 0.0
    %261 = vmatprep.subr.mxu0 0.0
    %262 = vmatpush1.msra.mxu0 0.0
    %263 = vmatprep.subr.mxu0 0.0
    %264 = vmatpush1.msra.mxu0 %v228
    %265 = vmatprep.subr.mxu0 0.0
    %266 = vmatpush1.msra.mxu0 %v227
    %267 = vmatprep.subr.mxu0 0.0
    %268 = vmatpush1.msra.mxu0 %v226
    %269 = vmatprep.subr.mxu0 0.0
    %270 = vmatpush1.msra.mxu0 %v225
    %271 = vmatprep.subr.mxu0 0.0
    %272 = vmatpush2.msra.mxu0 0.0
    %273 = vmatprep.subr.mxu0 0.0
    %274 = vmatpush2.msra.mxu0 0.0
    %275 = vmatprep.subr.mxu0 0.0
    %276 = vmatpush2.msra.mxu0 0.0
    %277 = vmatprep.subr.mxu0 0.0
    %278 = vmatpush2.msra.mxu0 0.0
    %279 = vmatprep.subr.mxu0 0.0
    %280 = vmatpush2.msra.mxu0 0.0
    %281 = vmatprep.subr.mxu0 0.0
    %282 = vmatpush2.msra.mxu0 0.0
    %283 = vmatprep.subr.mxu0 0.0
    %284 = vmatpush2.msra.mxu0 0.0
    %285 = vmatprep.subr.mxu0 0.0
    %286 = vmatpush2.msra.mxu0 0.0
    %287 = vmatprep.subr.mxu0 0.0
    %288 = vmatpush2.msra.mxu0 0.0
    %289 = vmatprep.subr.mxu0 0.0
    %290 = vmatpush2.msra.mxu0 0.0
    %291 = vmatprep.subr.mxu0 0.0
    %292 = vmatpush2.msra.mxu0 0.0
    %293 = vmatprep.subr.mxu0 0.0
    %294 = vmatpush2.msra.mxu0 0.0
    %295 = vmatprep.subr.mxu0 0.0
    %296 = vmatpush2.msra.mxu0 0.0
    %297 = vmatprep.subr.mxu0 0.0
    %298 = vmatpush2.msra.mxu0 0.0
    %299 = vmatprep.subr.mxu0 0.0
    %300 = vmatpush2.msra.mxu0 0.0
    %301 = vmatprep.subr.mxu0 0.0
    %302 = vmatpush2.msra.mxu0 0.0
    %303 = vmatprep.mubr.f32.mxu0 0.0
    %304 = vmatmul.mubr.f32.gmra.mxu0 %v237
    %v305 = vpop.f32.mrf.mxu0
    %v306 = vadd.f32 %v234, %v305
    %v307 = vpop.f32.mrf.mxu0
    %308 = vdwg.mxu0
    %v309 = vxor.u32 %v306, 2147483648
    %v310 = vmul.f32 %v309, 1.442695
    %v311 = vpow.pop %v310
    %v312 = vadd.f32 %v311, 1.0
    %v313 = vrcp.pop %v312
    %v314 = vmul.f32 1.0, %v313
    %v315 = vsub.f32 1.0, %v314
    %317 = vrot.lane.b32.xlu0 %v315, 127
    %v318 = vpop.permute.xlu0 %317
    %v320 = vmul.f32 %v315, %v318
    %321 = vrot.lane.b32.xlu0 %v315, 126
    %v322 = vpop.permute.xlu0 %321
    %v324 = vmul.f32 %v320, %v322
    %325 = vrot.lane.b32.xlu0 %v315, 125
    %v326 = vpop.permute.xlu0 %325
    %v328 = vmul.f32 %v324, %v326
    %330 = vrot.lane.b32.xlu0 %v320, 1
    %v331 = vpop.permute.xlu0 %330
    %334 = vrot.lane.b32.xlu0 %v324, 2
    %v335 = vpop.permute.xlu0 %334
    %338 = vrot.lane.b32.xlu0 %v328, 3
    %v339 = vpop.permute.xlu0 %338
    %vm341 = vcmask 7168
    %v342 = vsel %vm341, %v315, %v331
    %vm343 = vcmask 15360
    %v344 = vsel %vm343, %v342, %v335
    %vm345 = vcmask 23552
    %v346 = vsel %vm345, %v344, %v339
    %vm347 = vcmask 31744
    %v348 = vsel %vm347, %v346, 0.0
    %349 = vadd.xlane.f32.xlu0 %v348
    %v350 = vpop.xlane.xlu0 %349
    %v351 = vsub.f32 0.0, %v350
    %353 = vrot.lane.b32.xlu0 %v306, 32
    %v354 = vpop.permute.xlu0 %353
    %357 = vrot.lane.b32.xlu0 %v314, 36
    %v358 = vpop.permute.xlu0 %357
    %361 = vrot.lane.b32.xlu0 %v346, 40
    %v362 = vpop.permute.xlu0 %361
    %v364 = vsel %vm65, %v224, %v354
    %vm365 = vcmask 293888
    %v366 = vsel %vm365, %v364, %v358
    %vm367 = vcmask 326656
    %v368 = vsel %vm367, %v366, %v362
    %vm369 = vcmask 359424
    %v370 = vsel %vm369, %v368, %v351
    %vm371 = vcmask 367616
    %372 = vst.msk [vmem:[#allocation7] sm:$0xff] %vm371, %v370
    // Predicated region
    $region38: #{tpu_custom_call.1} parent=1 // pred_check
      _
    $region39: #{tpu_custom_call.1} parent=1 // pred_check_branch
      %374 = sbr.rel (0) target = $region41
    $region40: #{tpu_custom_call.1} parent=1 // pred_region
      %s376 = ssub.s32 128, 128
      %377 = vsyncadd [#allocation4], %s376
      %s379 = sshll.u32 [#allocation7], 4
      %s380 = int_to_ptr.vmem [resolvable:$true] %s379
      %382 = dma.vmem_to_hbm [thread:$0]  %s380, 128, %s7, [#allocation4]
    $region41: #{tpu_custom_call.1} parent=1 // pred_fallthru
      _
    // Predicated region
    $region42: #{tpu_custom_call.1} parent=1 // pred_check
      _
    $region43: #{tpu_custom_call.1} parent=1 // pred_check_branch
      %384 = sbr.rel (0) target = $region45
    $region44: #{tpu_custom_call.1} parent=1 // pred_region
      %385 = dma.done [#allocation4], 128
    $region45: #{tpu_custom_call.1} parent=1 // pred_fallthru
      _
    %386 = vsyncpa [#allocation3], 1
    %387 = vsyncpa [#allocation6], 1
    %388 = vsyncpa [#allocation4], 1

</llo_original>
